<compile_context>
chip_gen: v7x
topology: tpu7x:2x2x1
jax: 0.10.0
libtpu: 0.0.40
codegen_flags: <defaults>
</compile_context>

<pallas_src>
import functools
import math

import jax
import jax.numpy as jnp
from jax.experimental import pallas as pl
from jax.experimental.pallas import tpu as pltpu


def _layer_scale_kernel(x_ref, g_ref, o_ref):
    # x_ref: [tm, width] row tile; g_ref: [1, width] per-channel scale,
    # resident across the whole grid (constant index_map -> DMA'd once).
    # Compute in the promoted output dtype to match PyTorch type promotion.
    o_ref[...] = x_ref[...].astype(o_ref.dtype) * g_ref[...]


def _vmem_tile_budget_bytes():
    """Generation-aware VMEM budget for the streamed (double-buffered) blocks."""
    try:
        phys = pltpu.get_tpu_info().vmem_capacity_bytes
    except Exception:
        phys = 64 << 20  # conservative fallback: v7x per-TensorCore physical VMEM
    # ~1/4 of physical VMEM for the x-in + out blocks (each double-buffered);
    # the rest is headroom for gamma, semaphores and compiler scratch.
    # v5e/v6e (128 MiB) -> 32 MiB; v7x (64 MiB) -> 16 MiB.
    return max(8 << 20, phys // 4)


def _lane_dense_layout(M, C):
    """View the flat data as [rows, width] with width a multiple of 128.

    Returns (rows, width, reps) where gamma must be tiled `reps` times per row.
    Falls back to (M, C, 1) (masked partial stores) when the token count does
    not divide evenly.
    """
    if C % 128 == 0:
        return M, C, 1
    width = (C * 128) // math.gcd(C, 128)  # lcm(C, 128)
    reps = width // C
    if reps > 0 and M >= reps and M % reps == 0:
        return M // reps, width, reps
    return M, C, 1


def _choose_row_tile(rows, bytes_per_row, align, vmem_budget):
    """Row-tile size: VMEM-budgeted, sublane-aligned, multi-step when possible.

    bytes_per_row = (x-in + out) bytes for one row; each block is
    double-buffered by the BlockSpec pipeline, so live bytes ~ 2*tm*bytes_per_row.
    """
    if rows <= align:
        return rows  # one full tile; block == full dim satisfies the sublane rule

    def down(v):
        return max(align, (v // align) * align)

    tm_vmem = down(vmem_budget // (2 * max(1, bytes_per_row)))
    # Amortize the ~0.35 us fixed per-step cost: ~16 MiB of HBM traffic/step.
    tm_amortize = down((16 << 20) // max(1, bytes_per_row))
    tm = min(tm_vmem, tm_amortize)
    # Guarantee >= 2 grid steps: DMA/compute overlap + v7x megacore sharding.
    half = -(-rows // 2)                 # ceil(rows / 2)
    half = -(-half // align) * align     # round up to sublane alignment
    return max(align, min(tm, half))


@functools.partial(jax.jit, static_argnames=("inplace",))
def layer_scale_pallas(x, gamma, *, inplace=False):
    """LayerScale forward: y = x * gamma (gamma broadcast along the last dim).

    x: [..., C], gamma: [C].  Output dtype = jnp.result_type(x.dtype, gamma.dtype).
    """
    orig_shape = x.shape
    C = orig_shape[-1]
    M = math.prod(orig_shape[:-1]) if len(orig_shape) > 1 else 1

    out_dtype = jnp.result_type(x.dtype, gamma.dtype)
    x_item = jnp.dtype(x.dtype).itemsize
    o_item = jnp.dtype(out_dtype).itemsize

    # Lane-dense layout: make the last dim a multiple of 128 when possible so
    # the output is written with full (unmasked) vector stores.
    rows, width, reps = _lane_dense_layout(M, C)
    x2d = x.reshape(rows, width)
    g_row = jnp.tile(gamma.astype(out_dtype), reps).reshape(1, width)

    # Sublane alignment for the narrowest streamed dtype (8 f32 / 16 bf16 / 32 i8).
    align = max(8, 32 // min(x_item, o_item))

    bytes_per_row = width * (x_item + o_item)
    vmem_budget = _vmem_tile_budget_bytes()
    tm = _choose_row_tile(rows, bytes_per_row, align, vmem_budget)
    grid = (pl.cdiv(rows, tm),)

    # Scoped-VMEM limit: double-buffered x/out blocks + gamma + headroom.
    # Raising it past the generation defaults (16 MiB v5e / 32 MiB v6e, v7x)
    # is what lets the adaptive tile stay in the 85%+ HBM-roofline regime.
    live_bytes = 2 * tm * bytes_per_row + 2 * width * o_item
    vmem_limit = int(max(vmem_budget, live_bytes) + (4 << 20))

    cost = pl.CostEstimate(
        flops=M * C,  # one multiply per element
        transcendentals=0,
        bytes_accessed=M * C * x_item + M * C * o_item + C * o_item,
    )

    # Mirror the PyTorch inplace=True path (aliasing only; math identical).
    io_aliases = {0: 0} if (inplace and out_dtype == x.dtype) else {}

    out2d = pl.pallas_call(
        _layer_scale_kernel,
        out_shape=jax.ShapeDtypeStruct((rows, width), out_dtype),
        grid_spec=pltpu.PrefetchScalarGridSpec(
            num_scalar_prefetch=0,
            grid=grid,
            in_specs=[
                pl.BlockSpec((tm, width), lambda i: (i, 0)),  # x row tile
                pl.BlockSpec((1, width), lambda i: (0, 0)),   # gamma (resident)
            ],
            out_specs=pl.BlockSpec((tm, width), lambda i: (i, 0)),
        ),
        compiler_params=pltpu.CompilerParams(
            dimension_semantics=("parallel",),
            vmem_limit_bytes=vmem_limit,
        ),
        cost_estimate=cost,
        input_output_aliases=io_aliases,
    )(x2d, g_row)

    return out2d.reshape(orig_shape)


def _reference(x, gamma):
    # PyTorch: x * gamma with standard type promotion.
    out_dtype = jnp.result_type(x.dtype, gamma.dtype)
    return x.astype(out_dtype) * gamma.astype(out_dtype)


if __name__ == "__main__":
    key = jax.random.PRNGKey(0)
    kx, kg, kx2, kg2, kx3 = jax.random.split(key, 5)
    init_values = 1e-5

    # 1) Small shape consistent with the module: tokens [B, N, dim].
    B, N, dim = 2, 8, 32
    x = jax.random.normal(kx, (B, N, dim), dtype=jnp.float32)
    gamma = init_values * (1.0 + jax.random.normal(kg, (dim,), jnp.float32))
    out = jax.block_until_ready(layer_scale_pallas(x, gamma))
    ref = _reference(x, gamma)
    assert out.shape == x.shape and out.dtype == ref.dtype
    assert jnp.allclose(out, ref, atol=1e-6, rtol=1e-6), "mismatch vs reference (f32)"

    # 2) Non-128-multiple channel count (ViT-style dim=192) with a multi-step
    #    grid — exercises the lane-dense repack and adaptive row tile.
    B2, N2, dim2 = 4, 128, 192
    x2 = jax.random.normal(kx2, (B2, N2, dim2), dtype=jnp.float32)
    gamma2 = init_values * (1.0 + jax.random.normal(kg2, (dim2,), jnp.float32))
    out2 = jax.block_until_ready(layer_scale_pallas(x2, gamma2))
    ref2 = _reference(x2, gamma2)
    assert out2.shape == x2.shape
    assert jnp.allclose(out2, ref2, atol=1e-6, rtol=1e-6), "mismatch vs reference (192)"

    # 3) bf16 activations with an f32 gamma parameter — promotion path.
    x3 = jax.random.normal(kx3, (B, N, dim), dtype=jnp.bfloat16)
    out3 = jax.block_until_ready(layer_scale_pallas(x3, gamma))
    ref3 = _reference(x3, gamma)
    assert out3.dtype == jnp.float32
    assert jnp.allclose(out3, ref3, atol=1e-6, rtol=1e-6), "mismatch vs reference (bf16)"

    print("KERNEL_OK")
</pallas_src>

<mosaic_0001>
module attributes {stable_mosaic.version = 11 : i64} {
  func.func @_layer_scale_kernel(%arg0: i32, %arg1: memref<4x128xf32, #tpu.memory_space<vmem>>, %arg2: memref<1x128xf32, #tpu.memory_space<vmem>>, %arg3: memref<4x128xf32, #tpu.memory_space<vmem>>) attributes {dimension_semantics = [#tpu.dimension_semantics<parallel>], iteration_bounds = array<i64: 1>, scalar_prefetch = 0 : i64, scratch_operands = 0 : i64, tpu.core_type = #tpu.core_type<tc>, window_params = [{transform_indices = @transform_0, window_bounds = array<i64: 4, 128>}, {pipeline_mode = #tpu.pipeline_mode<synchronous>, transform_indices = @transform_1, window_bounds = array<i64: 1, 128>}, {transform_indices = @transform_2, window_bounds = array<i64: 4, 128>}]} {
    %c0 = arith.constant 0 : index
    %c0_0 = arith.constant 0 : index
    %0 = vector.load %arg1[%c0, %c0_0] : memref<4x128xf32, #tpu.memory_space<vmem>>, vector<4x128xf32>
    %c0_1 = arith.constant 0 : index
    %c0_2 = arith.constant 0 : index
    %1 = vector.load %arg2[%c0_1, %c0_2] : memref<1x128xf32, #tpu.memory_space<vmem>>, vector<1x128xf32>
    %2 = vector.broadcast %1 : vector<1x128xf32> to vector<4x128xf32>
    %3 = arith.mulf %0, %2 : vector<4x128xf32>
    %c0_3 = arith.constant 0 : index
    %c0_4 = arith.constant 0 : index
    %4 = vector.load %arg3[%c0_3, %c0_4] : memref<4x128xf32, #tpu.memory_space<vmem>>, vector<4x128xf32>
    tpu.vector_store %arg3[%c0_3, %c0_4], %3 {strides = array<i32>} : memref<4x128xf32, #tpu.memory_space<vmem>>, vector<4x128xf32>,
    return
  }
  func.func @transform_0(%arg0: i32) -> (i32, i32) {
    %c0_i32 = arith.constant 0 : i32
    %c0_i32_0 = arith.constant 0 : i32
    return %arg0, %c0_i32 : i32, i32
  }
  func.func @transform_1(%arg0: i32) -> (i32, i32) {
    %c0_i32 = arith.constant 0 : i32
    %c0_i32_0 = arith.constant 0 : i32
    %c0_i32_1 = arith.constant 0 : i32
    return %c0_i32, %c0_i32_0 : i32, i32
  }
  func.func @transform_2(%arg0: i32) -> (i32, i32) {
    %c0_i32 = arith.constant 0 : i32
    %c0_i32_0 = arith.constant 0 : i32
    return %arg0, %c0_i32 : i32, i32
  }
}

</mosaic_0001>

<llo_original>
// kernel: tile.8
$region0: #{tile.8}
  #allocation0 [shape = 's32[1]{0}', space=sflag, size = 0x4, scoped, tag = 'scoped memory for tile.8']
  %s0 = inlined_call_operand.vmem [shape: f32[32], index: 0, kind: input, shape index: {}]
  %s1 = inlined_call_operand.vmem [shape: f32[4,32], index: 1, kind: output, shape index: {}]
  // Predicated region
  $region2: #{tile.8} parent=0 // pred_check
    _
  $region3: #{tile.8} parent=0 // pred_check_branch
    %3 = sbr.rel (0) target = $region5
  $region4: #{tile.8} parent=0 // pred_region
    _
  $region5: #{tile.8} parent=0 // pred_fallthru
    _
  %v4 = vld [vmem:[%s0] ss:$0 sm:$0xff]
  %5 = vst [vmem:[%s1] sm:$0xf] %v4

// kernel: tile.9
$region0: #{tile.9}
  %s0 = inlined_call_operand.vmem [shape: f32[4,32], index: 0, kind: input, shape index: {}]
  %s1 = inlined_call_operand.vmem [shape: f32[1,128], index: 1, kind: output, shape index: {}]
  $region1: #{tile.9} parent=0
    #allocation0 [shape = 'u8[4096]{0}', space=vmem, size = 0x1000, scoped, tag = 'scoped mem for output reshape']
    #allocation1 [shape = 'u8[4096]{0}', space=vmem, size = 0x1000, scoped, tag = 'scoped mem for input reshape']
    %s3 = sshllo.u32 0, 4
    %v4 = vld [vmem:[%s0] sm:%s3]
    %5 = vst [vmem:[#allocation1] sm:%s3] %v4
    %v6 = vld [vmem:[#allocation1] sm:$0x1]
    %vm7 = vcmask 261120
    %8 = vst.msk [vmem:[#allocation0] sm:$0x1] %vm7, %v6
    %s9 = scalar_lea.vmem [#allocation1], 3
    %v10 = vld [vmem:[%s9] sm:$0x1]
    %11 = vrot.lane.b32.xlu0 %v10, 96
    %v12 = vpop.permute.xlu0 %11
    %vm13 = vcmask 1048320
    %14 = vst.msk [vmem:[#allocation0] sm:$0x1] %vm13, %v12
    %s15 = scalar_lea.vmem [#allocation1], 2
    %v16 = vld [vmem:[%s15] sm:$0x1]
    %17 = vrot.lane.b32.xlu0 %v16, 64
    %v18 = vpop.permute.xlu0 %17
    %vm19 = vcmask 785920
    %20 = vst.msk [vmem:[#allocation0] sm:$0x1] %vm19, %v18
    %s21 = scalar_lea.vmem [#allocation1], 1
    %v22 = vld [vmem:[%s21] sm:$0x1]
    %23 = vrot.lane.b32.xlu0 %v22, 32
    %v24 = vpop.permute.xlu0 %23
    %vm25 = vcmask 523520
    %26 = vst.msk [vmem:[#allocation0] sm:$0x1] %vm25, %v24
    %s28 = sshllo.u32 0, 1
    %v30 = vld [vmem:[#allocation0] sm:%s28]
    %s31 = sshllo.u32 0, 1
    %32 = vst [vmem:[%s1] sm:%s31] %v30

// kernel: layer_scale_pallas.1
$region0: #{layer_scale_pallas.1}
  #allocation0 [shape = 'u32[]', space=smem, size = 0x4, offset = 0x4, fixed_abs, tag = 'smem constant byte address 0x4 - core index']
  #allocation1 [shape = 'u32[144,128]{1,0:T(1,128)}', space=vmem, size = 0x12000, scoped, tag = 'internal scratch']
  %s0 = inlined_call_operand.vmem [shape: f32[4,128], index: 0, kind: input, shape index: {}]
  %s1 = inlined_call_operand.vmem [shape: f32[1,128], index: 1, kind: input, shape index: {}]
  %s2 = inlined_call_operand.vmem [shape: f32[4,128], index: 2, kind: output, shape index: {}]
  %s3 = sld [smem:[#allocation0]]
  $region18: #{layer_scale_pallas.1} parent=0
    _
  %s5 = ssub.s32 1, %s3
  %s6 = scalar_select 0, %s5, %s3
  // Predicated region
  $region2: #{layer_scale_pallas.1} parent=0 // pred_check
    _
  $region3: #{layer_scale_pallas.1} parent=0 // pred_check_branch
    %8 = sbr.rel (0) target = $region5
  $region4: #{layer_scale_pallas.1} parent=0 // pred_region
    _
  $region5: #{layer_scale_pallas.1} parent=0 // pred_fallthru
    _
  // Predicated region
  $region6: #{layer_scale_pallas.1} parent=0 // pred_check
    _
  $region7: #{layer_scale_pallas.1} parent=0 // pred_check_branch
    %10 = sbr.rel (0) target = $region9
  $region8: #{layer_scale_pallas.1} parent=0 // pred_region
    _
  $region9: #{layer_scale_pallas.1} parent=0 // pred_fallthru
    _
  %v11 = vld [vmem:[%s0] sm:$0xf]
  %v12 = vld [vmem:[%s1] sm:$0x1]
  %v14 = vlaneseq
  %v15 = vshrl.u32 %v14, 7
  %v16 = vsub.s32 0, %v15
  %v17 = vrot.slane %v12, %v16
  %v19 = vmul.f32 %v11, %v17
  %20 = vst [vmem:[%s2] sm:$0xf] %v19
  // Predicated region
  $region10: #{layer_scale_pallas.1} parent=0 // pred_check
    _
  $region11: #{layer_scale_pallas.1} parent=0 // pred_check_branch
    %22 = sbr.rel (0) target = $region13
  $region12: #{layer_scale_pallas.1} parent=0 // pred_region
    _
  $region13: #{layer_scale_pallas.1} parent=0 // pred_fallthru
    _
  // Predicated region
  $region14: #{layer_scale_pallas.1} parent=0 // pred_check
    _
  $region15: #{layer_scale_pallas.1} parent=0 // pred_check_branch
    %24 = sbr.rel (0) target = $region17
  $region16: #{layer_scale_pallas.1} parent=0 // pred_region
    _
  $region17: #{layer_scale_pallas.1} parent=0 // pred_fallthru
    _

</llo_original>
